<compile_context>
chip_gen: v6e
topology: v6e:2x2x1
jax: 0.10.0
libtpu: 0.0.40
codegen_flags: <defaults>
</compile_context>

<pallas_src>
import jax
import jax.numpy as jnp
from jax import lax
from jax.experimental import pallas as pl
from jax.experimental.pallas import tpu as pltpu

# ----- model dimensions (small, consistent with the forward pass) -----------
BATCH = 2       # number of sentences
SEQ = 8         # tokens per sentence
HIDDEN = 32     # stand-in for xlm hidden_size (1280 in the real checkpoint)
NUM_LABELS = 4  # probe output size
VOCAB = 64      # stand-in vocab for the deterministic embedding

TM_MAX = 1024   # row-tile cap: only a few MiB of VMEM even at H=1280, far
                # below v5e (16 MiB) / v6e (32 MiB) / v7x (32 MiB) scoped
                # defaults; the binding constraint is ">=2 grid steps" (v7x).
ROW_GRANULE = 8  # 32-bit streamed data (int32 ids / f32 out) -> sublane 8.
                 # Use 16 if the streamed kernel input were bf16.


def _round_up(x, m):
    return ((x + m - 1) // m) * m


def _choose_tm(n_rows, *, granule=ROW_GRANULE, tm_max=TM_MAX):
    # Aim for at least 2 grid steps so dimension_semantics=("parallel",)
    # shards across v7x's two TensorCores (free / harmless on v5e & v6e).
    tm = _round_up(pl.cdiv(n_rows, 2), granule)
    tm = min(tm, tm_max, _round_up(n_rows, granule))
    return max(tm, granule)


# ----------------------------- Pallas kernel --------------------------------
def fused_probe_kernel(ids_ref, emb_ref, w_ref, b_ref, o_ref):
    # ids_ref: (TM, 1) int32  -- token ids for this row tile (only streamed input)
    # emb_ref: (V, H)  f32    -- stand-in encoder table, VMEM-resident
    # w_ref:   (H, L)  f32    -- probe weight, VMEM-resident
    # b_ref:   (1, L)  f32    -- probe bias, VMEM-resident
    # o_ref:   (TM, L) f32
    tm = ids_ref.shape[0]
    vocab = emb_ref.shape[0]
    # Embedding gather as a one-hot matmul (TPU-safe gather; MXU does the row
    # selection).
    # TODO(synk): the real frozen XLM-100-1280 encoder is a pretrained
    # checkpoint with no in-script Pallas equivalent; with the real encoder,
    # this producer stage would instead stream its bf16 last_hidden_state as
    # the kernel input (same row-tiled probe matmul below).
    onehot = (ids_ref[...] ==
              lax.broadcasted_iota(jnp.int32, (tm, vocab), 1)
              ).astype(emb_ref.dtype)                        # (TM, V)
    hidden = jnp.dot(onehot, emb_ref[...],
                     preferred_element_type=jnp.float32)     # (TM, H)
    logits = jnp.dot(hidden, w_ref[...],
                     preferred_element_type=jnp.float32)     # (TM, L)
    # bias add on the small (TM, L) accumulator only.
    o_ref[...] = (logits + b_ref[...]).astype(o_ref.dtype)


# ------------------------------ forward pass ---------------------------------
def linear_probe_xlm_forward(sentences, emb_table, probe_w, probe_b):
    """sentences: (B, S) int32 token ids -> logits (B, S, L) f32."""
    B, S = sentences.shape
    V, H = emb_table.shape
    L = probe_w.shape[1]
    N = B * S

    ids = sentences.reshape(N, 1).astype(jnp.int32)   # metadata-only reshape
    b2d = probe_b.reshape(1, L)

    TM = _choose_tm(N)
    grid = (pl.cdiv(N, TM),)   # partial last block handled by Pallas masking

    cost = pl.CostEstimate(
        flops=2 * N * V * H + 2 * N * H * L,
        transcendentals=0,
        bytes_accessed=(N * 4          # ids (int32), the only streamed input
                        + V * H * 4    # embedding table (f32, resident)
                        + H * L * 4    # probe weight (f32, resident)
                        + L * 4        # probe bias
                        + N * L * 4),  # logits out (f32, unpadded)
    )

    out = pl.pallas_call(
        fused_probe_kernel,
        out_shape=jax.ShapeDtypeStruct((N, L), jnp.float32),
        grid_spec=pl.GridSpec(
            grid=grid,
            in_specs=[
                # stream only the token ids per row tile
                pl.BlockSpec((TM, 1), lambda i: (i, 0)),
                # table / weight / bias: constant block index -> stay
                # VMEM-resident across grid steps (no re-DMA)
                pl.BlockSpec((V, H), lambda i: (0, 0)),
                pl.BlockSpec((H, L), lambda i: (0, 0)),
                pl.BlockSpec((1, L), lambda i: (0, 0)),
            ],
            # exact (N, L) output: no padded lanes written, no post-slice
            # pass; each (TM, L) tile is a contiguous chunk of the row-major
            # output array.
            out_specs=pl.BlockSpec((TM, L), lambda i: (i, 0)),
        ),
        compiler_params=pltpu.CompilerParams(
            dimension_semantics=("parallel",)),
        cost_estimate=cost,
    )(ids, emb_table, probe_w, b2d)

    return out.reshape(B, S, L)


# -------------------- module wrapper (params + forward) ---------------------
def init_params(key):
    k_emb, k_w, k_b = jax.random.split(key, 3)
    # Stand-in for the frozen pretrained XLM encoder's last_hidden_state.
    emb_table = jax.random.normal(k_emb, (VOCAB, HIDDEN), jnp.float32) * 0.02
    # nn.Linear(hidden, num_labels): stored transposed as (H, L) plus bias (L,).
    bound = 1.0 / jnp.sqrt(HIDDEN)
    probe_w = jax.random.uniform(k_w, (HIDDEN, NUM_LABELS), jnp.float32,
                                 -bound, bound)
    probe_b = jax.random.uniform(k_b, (NUM_LABELS,), jnp.float32,
                                 -bound, bound)
    return emb_table, probe_w, probe_b


if __name__ == "__main__":
    key = jax.random.PRNGKey(0)
    k_tok, k_params = jax.random.split(key)
    sentences = jax.random.randint(k_tok, (BATCH, SEQ), 0, VOCAB, jnp.int32)
    emb_table, probe_w, probe_b = init_params(k_params)

    logits = linear_probe_xlm_forward(sentences, emb_table, probe_w, probe_b)
    logits = jax.block_until_ready(logits)

    # correctness check against a plain-JAX f32 reference
    # (embedding lookup stand-in for the frozen encoder, then the probe)
    hs = emb_table[sentences]                  # (B, S, H)
    ref = hs @ probe_w + probe_b               # (B, S, L)
    assert logits.shape == (BATCH, SEQ, NUM_LABELS)
    assert jnp.allclose(logits, ref, atol=1e-3, rtol=1e-3)

    print("KERNEL_OK")
</pallas_src>

<mosaic_0001>
module attributes {stable_mosaic.version = 11 : i64} {
  func.func @fused_probe_kernel(%arg0: i32, %arg1: memref<8x1xi32, #tpu.memory_space<vmem>>, %arg2: memref<64x32xf32, #tpu.memory_space<vmem>>, %arg3: memref<32x4xf32, #tpu.memory_space<vmem>>, %arg4: memref<1x4xf32, #tpu.memory_space<vmem>>, %arg5: memref<8x4xf32, #tpu.memory_space<vmem>>) attributes {dimension_semantics = [#tpu.dimension_semantics<parallel>], iteration_bounds = array<i64: 2>, scalar_prefetch = 0 : i64, scratch_operands = 0 : i64, tpu.core_type = #tpu.core_type<tc>, window_params = [{transform_indices = @transform_0, window_bounds = array<i64: 8, 1>}, {pipeline_mode = #tpu.pipeline_mode<synchronous>, transform_indices = @transform_1, window_bounds = array<i64: 64, 32>}, {pipeline_mode = #tpu.pipeline_mode<synchronous>, transform_indices = @transform_2, window_bounds = array<i64: 32, 4>}, {pipeline_mode = #tpu.pipeline_mode<synchronous>, transform_indices = @transform_3, window_bounds = array<i64: 1, 4>}, {transform_indices = @transform_4, window_bounds = array<i64: 8, 4>}]} {
    %c0 = arith.constant 0 : index
    %c0_0 = arith.constant 0 : index
    %0 = vector.load %arg1[%c0, %c0_0] : memref<8x1xi32, #tpu.memory_space<vmem>>, vector<8x1xi32>
    %1 = tpu.iota {dimensions = array<i32: 1>} : vector<8x64xi32>
    %2 = vector.broadcast %0 : vector<8x1xi32> to vector<8x64xi32>
    %3 = arith.cmpi eq, %2, %1 : vector<8x64xi32>
    %4 = arith.extui %3 : vector<8x64xi1> to vector<8x64xi32>
    %5 = arith.sitofp %4 : vector<8x64xi32> to vector<8x64xf32>
    %c0_1 = arith.constant 0 : index
    %c0_2 = arith.constant 0 : index
    %6 = vector.load %arg2[%c0_1, %c0_2] : memref<64x32xf32, #tpu.memory_space<vmem>>, vector<64x32xf32>
    %cst = arith.constant dense<0.000000e+00> : vector<8x32xf32>
    %7 = tpu.matmul %5, %6, %cst {dimension_numbers = #tpu.dot_dimension_numbers<[1], [0], [0], [1], [0, 0, 1, 1], [], []>} : vector<8x64xf32>, vector<64x32xf32>, vector<8x32xf32> -> vector<8x32xf32>
    %c0_3 = arith.constant 0 : index
    %c0_4 = arith.constant 0 : index
    %8 = vector.load %arg3[%c0_3, %c0_4] : memref<32x4xf32, #tpu.memory_space<vmem>>, vector<32x4xf32>
    %cst_5 = arith.constant dense<0.000000e+00> : vector<8x4xf32>
    %9 = tpu.matmul %7, %8, %cst_5 {dimension_numbers = #tpu.dot_dimension_numbers<[1], [0], [0], [1], [0, 0, 1, 1], [], []>} : vector<8x32xf32>, vector<32x4xf32>, vector<8x4xf32> -> vector<8x4xf32>
    %c0_6 = arith.constant 0 : index
    %c0_7 = arith.constant 0 : index
    %10 = vector.load %arg4[%c0_6, %c0_7] : memref<1x4xf32, #tpu.memory_space<vmem>>, vector<1x4xf32>
    %11 = vector.broadcast %10 : vector<1x4xf32> to vector<8x4xf32>
    %12 = arith.addf %9, %11 : vector<8x4xf32>
    %c0_8 = arith.constant 0 : index
    %c0_9 = arith.constant 0 : index
    %13 = vector.load %arg5[%c0_8, %c0_9] : memref<8x4xf32, #tpu.memory_space<vmem>>, vector<8x4xf32>
    tpu.vector_store %arg5[%c0_8, %c0_9], %12 {strides = array<i32>} : memref<8x4xf32, #tpu.memory_space<vmem>>, vector<8x4xf32>,
    return
  }
  func.func @transform_0(%arg0: i32) -> (i32, i32) {
    %c0_i32 = arith.constant 0 : i32
    %c0_i32_0 = arith.constant 0 : i32
    return %arg0, %c0_i32 : i32, i32
  }
  func.func @transform_1(%arg0: i32) -> (i32, i32) {
    %c0_i32 = arith.constant 0 : i32
    %c0_i32_0 = arith.constant 0 : i32
    %c0_i32_1 = arith.constant 0 : i32
    return %c0_i32, %c0_i32_0 : i32, i32
  }
  func.func @transform_2(%arg0: i32) -> (i32, i32) {
    %c0_i32 = arith.constant 0 : i32
    %c0_i32_0 = arith.constant 0 : i32
    %c0_i32_1 = arith.constant 0 : i32
    return %c0_i32, %c0_i32_0 : i32, i32
  }
  func.func @transform_3(%arg0: i32) -> (i32, i32) {
    %c0_i32 = arith.constant 0 : i32
    %c0_i32_0 = arith.constant 0 : i32
    %c0_i32_1 = arith.constant 0 : i32
    return %c0_i32, %c0_i32_0 : i32, i32
  }
  func.func @transform_4(%arg0: i32) -> (i32, i32) {
    %c0_i32 = arith.constant 0 : i32
    %c0_i32_0 = arith.constant 0 : i32
    return %arg0, %c0_i32 : i32, i32
  }
}

</mosaic_0001>

<llo_original>
// kernel: tpu_custom_call.1
$region0: #{tpu_custom_call.1}
  #allocation0 [shape = 'u32[]', space=smem, size = 0x4, offset = 0x4, fixed_abs, tag = 'smem constant byte address 0x4 - core index']
  #allocation1 [shape = 'u32[144,128]{1,0:T(1,128)}', space=vmem, size = 0x12000, scoped, tag = 'internal scratch']
  %s0 = inlined_call_operand.vmem [shape: s32[16,1], index: 0, kind: input, shape index: {}]
  %s1 = inlined_call_operand.vmem [shape: f32[64,32], index: 1, kind: input, shape index: {}]
  %s2 = inlined_call_operand.vmem [shape: f32[32,4], index: 2, kind: input, shape index: {}]
  %s3 = inlined_call_operand.vmem [shape: f32[1,4], index: 3, kind: input, shape index: {}]
  %s4 = inlined_call_operand.vmem [shape: f32[16,4], index: 4, kind: output, shape index: {}]
  %s5 = sld [smem:[#allocation0]]
  $region49: #{tpu_custom_call.1} parent=0
    _
  %s7 = ssub.s32 1, %s5
  %s8 = scalar_select 0, %s7, %s5
  loop: start=0, step=1, limit=4
  $region2: #{tpu_custom_call.1} parent=0 // loop_pre_header
    _
  $region3: #{tpu_custom_call.1} parent=0 // loop_header
    %s10 = sphi 0, %s14
    %p11 = scmp.ge.s32.totalorder %s10, 4
    %s20 = sphi 0, %s22
    %s23 = sphi 0, %s20
    %s24 = sphi 0, %s23
    %s40 = sphi 0, %s24
    %s44 = sphi 0, %s44
    %s46 = sphi 0, %s44
    %s47 = sphi 0, %s46
    %s61 = sphi 0, %s47
    %s65 = sphi 0, %s65
    %s67 = sphi 0, %s65
    %s68 = sphi 0, %s67
    %s82 = sphi 0, %s68
    %s86 = sphi 0, %s86
    %s88 = sphi 0, %s86
    %s89 = sphi 0, %s88
    %s103 = sphi 0, %s89
    %s109 = sphi 0, %s111
    %s112 = sphi 0, %s109
    %s113 = sphi 0, %s112
    %s129 = sphi 0, %s113
  $region4: #{tpu_custom_call.1} parent=0 // loop_header_branch
    %13 = sbr.rel (%p11) target = $region8
  $region5: #{tpu_custom_call.1} parent=0 // loop_body
    %s15 = ssub.s32 %s10, 1
    %s16 = ssub.s32 %s10, 2
    %s17 = sadd.s32 %s10, 1
    %s18 = ssub.s32 %s10, %s17
    %p19 = scmp.eq.s32.totalorder %s18, 0
    %s21 = sadd.s32 %s20, 1
    %s22 = scalar_select %p19, %s20, %s21
    %p25 = pneg %p19
    %p26 = scmp.eq.s32.totalorder %s10, 1
    %p27 = por %p25, %p26
    %p28 = scmp.ne.s32.totalorder %s20, %s23
    %p29 = scmp.eq.s32.totalorder %s10, 0
    %p30 = por %p28, %p29
    %p31 = scmp.ne.s32.totalorder %s20, %s23
    %p32 = scmp.eq.s32.totalorder %s15, 1
    %p33 = por %p31, %p32
    %p34 = scmp.ne.s32.totalorder %s23, %s24
    %p35 = scmp.eq.s32.totalorder %s15, 0
    %p36 = por %p34, %p35
    %p37 = scmp.ne.s32.totalorder %s23, %s24
    %p38 = scmp.eq.s32.totalorder %s16, 1
    %p39 = por %p37, %p38
    %p41 = scmp.ne.s32.totalorder %s24, %s40
    %p42 = scmp.eq.s32.totalorder %s16, 0
    %p43 = por %p41, %p42
    %s45 = sadd.s32 %s44, 1
    %p48 = scmp.eq.s32.totalorder %s10, 1
    %p49 = scmp.ne.s32.totalorder %s44, %s46
    %p50 = scmp.eq.s32.totalorder %s10, 0
    %p51 = por %p49, %p50
    %p52 = scmp.ne.s32.totalorder %s44, %s46
    %p53 = scmp.eq.s32.totalorder %s15, 1
    %p54 = por %p52, %p53
    %p55 = scmp.ne.s32.totalorder %s46, %s47
    %p56 = scmp.eq.s32.totalorder %s15, 0
    %p57 = por %p55, %p56
    %p58 = scmp.ne.s32.totalorder %s46, %s47
    %p59 = scmp.eq.s32.totalorder %s16, 1
    %p60 = por %p58, %p59
    %p62 = scmp.ne.s32.totalorder %s47, %s61
    %p63 = scmp.eq.s32.totalorder %s16, 0
    %p64 = por %p62, %p63
    %s66 = sadd.s32 %s65, 1
    %p69 = scmp.eq.s32.totalorder %s10, 1
    %p70 = scmp.ne.s32.totalorder %s65, %s67
    %p71 = scmp.eq.s32.totalorder %s10, 0
    %p72 = por %p70, %p71
    %p73 = scmp.ne.s32.totalorder %s65, %s67
    %p74 = scmp.eq.s32.totalorder %s15, 1
    %p75 = por %p73, %p74
    %p76 = scmp.ne.s32.totalorder %s67, %s68
    %p77 = scmp.eq.s32.totalorder %s15, 0
    %p78 = por %p76, %p77
    %p79 = scmp.ne.s32.totalorder %s67, %s68
    %p80 = scmp.eq.s32.totalorder %s16, 1
    %p81 = por %p79, %p80
    %p83 = scmp.ne.s32.totalorder %s68, %s82
    %p84 = scmp.eq.s32.totalorder %s16, 0
    %p85 = por %p83, %p84
    %s87 = sadd.s32 %s86, 1
    %p90 = scmp.eq.s32.totalorder %s10, 1
    %p91 = scmp.ne.s32.totalorder %s86, %s88
    %p92 = scmp.eq.s32.totalorder %s10, 0
    %p93 = por %p91, %p92
    %p94 = scmp.ne.s32.totalorder %s86, %s88
    %p95 = scmp.eq.s32.totalorder %s15, 1
    %p96 = por %p94, %p95
    %p97 = scmp.ne.s32.totalorder %s88, %s89
    %p98 = scmp.eq.s32.totalorder %s15, 0
    %p99 = por %p97, %p98
    %p100 = scmp.ne.s32.totalorder %s88, %s89
    %p101 = scmp.eq.s32.totalorder %s16, 1
    %p102 = por %p100, %p101
    %p104 = scmp.ne.s32.totalorder %s89, %s103
    %p105 = scmp.eq.s32.totalorder %s16, 0
    %p106 = por %p104, %p105
    %s107 = ssub.s32 %s10, %s17
    %p108 = scmp.eq.s32.totalorder %s107, 0
    %s110 = sadd.s32 %s109, 1
    %s111 = scalar_select %p108, %s109, %s110
    %p114 = pneg %p108
    %p115 = scmp.eq.s32.totalorder %s10, 1
    %p116 = por %p114, %p115
    %p117 = scmp.ne.s32.totalorder %s109, %s112
    %p118 = scmp.eq.s32.totalorder %s10, 0
    %p119 = por %p117, %p118
    %p120 = scmp.ne.s32.totalorder %s109, %s112
    %p121 = scmp.eq.s32.totalorder %s15, 1
    %p122 = por %p120, %p121
    %p123 = scmp.ne.s32.totalorder %s112, %s113
    %p124 = scmp.eq.s32.totalorder %s15, 0
    %p125 = por %p123, %p124
    %p126 = scmp.ne.s32.totalorder %s112, %s113
    %p127 = scmp.eq.s32.totalorder %s16, 1
    %p128 = por %p126, %p127
    %p130 = scmp.ne.s32.totalorder %s113, %s129
    %p131 = scmp.eq.s32.totalorder %s16, 0
    %p132 = por %p130, %p131
    %p133 = scmp.le.s32.totalorder 1, %s10
    %p134 = scmp.lt.s32.totalorder %s10, 3
    %p135 = pnand %p133, %p134
    %p136 = pneg %p135
    // Predicated region
    $region9: #{tpu_custom_call.1} parent=5 // pred_check
      _
    $region10: #{tpu_custom_call.1} parent=5 // pred_check_branch
      %138 = sbr.rel (%p135) target = $region12
    $region11: #{tpu_custom_call.1} parent=5 // pred_region
      %s139 = ssub.s32 %s10, 1
      // Predicated region
      $region13: #{tpu_custom_call.1} parent=11 // pred_check
        %p140 = pneg %p57
      $region14: #{tpu_custom_call.1} parent=11 // pred_check_branch
        %142 = sbr.rel (%p140) target = $region16
      $region15: #{tpu_custom_call.1} parent=11 // pred_region
        _
      $region16: #{tpu_custom_call.1} parent=11 // pred_fallthru
        _
      // Predicated region
      $region17: #{tpu_custom_call.1} parent=11 // pred_check
        %p143 = pneg %p78
      $region18: #{tpu_custom_call.1} parent=11 // pred_check_branch
        %145 = sbr.rel (%p143) target = $region20
      $region19: #{tpu_custom_call.1} parent=11 // pred_region
        _
      $region20: #{tpu_custom_call.1} parent=11 // pred_fallthru
        _
      // Predicated region
      $region21: #{tpu_custom_call.1} parent=11 // pred_check
        %p146 = pneg %p99
      $region22: #{tpu_custom_call.1} parent=11 // pred_check_branch
        %148 = sbr.rel (%p146) target = $region24
      $region23: #{tpu_custom_call.1} parent=11 // pred_region
        _
      $region24: #{tpu_custom_call.1} parent=11 // pred_fallthru
        _
    $region12: #{tpu_custom_call.1} parent=5 // pred_fallthru
      _
    %p149 = scmp.lt.s32.totalorder %s10, 2
    // Predicated region
    $region25: #{tpu_custom_call.1} parent=5 // pred_check
      %p150 = pneg %p149
    $region26: #{tpu_custom_call.1} parent=5 // pred_check_branch
      %152 = sbr.rel (%p150) target = $region28
    $region27: #{tpu_custom_call.1} parent=5 // pred_region
      // Predicated region
      $region29: #{tpu_custom_call.1} parent=27 // pred_check
        %p153 = pneg %p30
      $region30: #{tpu_custom_call.1} parent=27 // pred_check_branch
        %155 = sbr.rel (%p153) target = $region32
      $region31: #{tpu_custom_call.1} parent=27 // pred_region
        %p156 = scmp.lt.s32.totalorder %s10, 1
        %s157 = scalar_select %p156, %s10, 1
        %s158 = smul.addr %s157, 8
        %s159 = scalar_lea.vmem %s0, %s158
      $region32: #{tpu_custom_call.1} parent=27 // pred_fallthru
        _
    $region28: #{tpu_custom_call.1} parent=5 // pred_fallthru
      _
    %p160 = scmp.le.s32.totalorder 1, %s10
    %p161 = scmp.lt.s32.totalorder %s10, 3
    %p162 = pnand %p160, %p161
    %p163 = pneg %p162
    // Predicated region
    $region33: #{tpu_custom_call.1} parent=5 // pred_check
      _
    $region34: #{tpu_custom_call.1} parent=5 // pred_check_branch
      %165 = sbr.rel (%p162) target = $region36
    $region35: #{tpu_custom_call.1} parent=5 // pred_region
      %s166 = ssub.s32 %s10, 1
      %p167 = scmp.lt.s32.totalorder %s15, 1
      %s168 = scalar_select %p167, %s15, 1
      %s169 = smul.addr %s168, 8
      %s170 = scalar_lea.vmem %s0, %s169
      %p171 = pneg %p36
      %p172 = pneg %p33
      %p173 = pneg %p57
      %p174 = pneg %p54
      %p175 = pneg %p78
      %p176 = pneg %p75
      %p177 = pneg %p99
      %p178 = pneg %p96
      %p179 = pneg %p125
      %p180 = pneg %p122
      %p181 = scmp.lt.s32.totalorder %s15, 1
      %s182 = scalar_select %p181, %s15, 1
      %s183 = smul.addr %s182, 8
      %s184 = scalar_lea.vmem %s4, %s183
      %p185 = scmp.lt.s32.totalorder %s15, 1
      %s186 = scalar_select %p185, %s15, 1
      %s187 = smul.addr %s186, 8
      %s188 = scalar_lea.vmem %s0, %s187
      %p189 = scmp.lt.s32.totalorder %s15, 1
      %s190 = scalar_select %p189, %s15, 1
      %s191 = smul.addr %s190, 8
      %s192 = scalar_lea.vmem %s4, %s191
      %v193 = vld [vmem:[%s188] sm:$0xff]
      %v194 = vlaneseq
      %v195 = vand.u32 %v194, 127
      %196 = vset.pattern.permute.xlu0 0
      %197 = vperm.xlu0 %196, %v193
      %v198 = vpop.permute.xlu0 %197
      %vm199 = vcmp.eq.s32.totalorder %v198, %v195
      %v200 = vsel %vm199, 1, 0
      %v201 = vcvt.s32.f32 %v200
      %v202 = vld [vmem:[%s1] sm:$0xff]
      %v203 = vld [vmem:[%s1 + $0x8] sm:$0xff]
      %v204 = vld [vmem:[%s1 + $0x10] sm:$0xff]
      %v205 = vld [vmem:[%s1 + $0x18] sm:$0xff]
      %v206 = vld [vmem:[%s1 + $0x20] sm:$0xff]
      %v207 = vld [vmem:[%s1 + $0x28] sm:$0xff]
      %v208 = vld [vmem:[%s1 + $0x30] sm:$0xff]
      %v209 = vld [vmem:[%s1 + $0x38] sm:$0xff]
      %vm210 = vcmask 523264
      %v212 = vsel %vm210, %v201, 0
      %214 = vmatprep.subr.mxu0 0.0
      %215 = vmatpush1.msra.mxu0 0.0
      %216 = vmatprep.subr.mxu0 0.0
      %217 = vmatpush1.msra.mxu0 0.0
      %218 = vmatprep.subr.mxu0 0.0
      %219 = vmatpush1.msra.mxu0 0.0
      %220 = vmatprep.subr.mxu0 0.0
      %221 = vmatpush1.msra.mxu0 0.0
      %222 = vmatprep.subr.mxu0 0.0
      %223 = vmatpush1.msra.mxu0 0.0
      %224 = vmatprep.subr.mxu0 0.0
      %225 = vmatpush1.msra.mxu0 0.0
      %226 = vmatprep.subr.mxu0 0.0
      %227 = vmatpush1.msra.mxu0 0.0
      %228 = vmatprep.subr.mxu0 0.0
      %229 = vmatpush1.msra.mxu0 0.0
      %230 = vmatprep.subr.mxu0 0.0
      %231 = vmatpush1.msra.mxu0 %v209
      %232 = vmatprep.subr.mxu0 0.0
      %233 = vmatpush1.msra.mxu0 %v208
      %234 = vmatprep.subr.mxu0 0.0
      %235 = vmatpush1.msra.mxu0 %v207
      %236 = vmatprep.subr.mxu0 0.0
      %237 = vmatpush1.msra.mxu0 %v206
      %238 = vmatprep.subr.mxu0 0.0
      %239 = vmatpush1.msra.mxu0 %v205
      %240 = vmatprep.subr.mxu0 0.0
      %241 = vmatpush1.msra.mxu0 %v204
      %242 = vmatprep.subr.mxu0 0.0
      %243 = vmatpush1.msra.mxu0 %v203
      %244 = vmatprep.subr.mxu0 0.0
      %245 = vmatpush1.msra.mxu0 %v202
      %246 = vmatprep.subr.mxu0 0.0
      %247 = vmatpush2.msra.mxu0 0.0
      %248 = vmatprep.subr.mxu0 0.0
      %249 = vmatpush2.msra.mxu0 0.0
      %250 = vmatprep.subr.mxu0 0.0
      %251 = vmatpush2.msra.mxu0 0.0
      %252 = vmatprep.subr.mxu0 0.0
      %253 = vmatpush2.msra.mxu0 0.0
      %254 = vmatprep.subr.mxu0 0.0
      %255 = vmatpush2.msra.mxu0 0.0
      %256 = vmatprep.subr.mxu0 0.0
      %257 = vmatpush2.msra.mxu0 0.0
      %258 = vmatprep.subr.mxu0 0.0
      %259 = vmatpush2.msra.mxu0 0.0
      %260 = vmatprep.subr.mxu0 0.0
      %261 = vmatpush2.msra.mxu0 0.0
      %262 = vmatprep.subr.mxu0 0.0
      %263 = vmatpush2.msra.mxu0 0.0
      %264 = vmatprep.subr.mxu0 0.0
      %265 = vmatpush2.msra.mxu0 0.0
      %266 = vmatprep.subr.mxu0 0.0
      %267 = vmatpush2.msra.mxu0 0.0
      %268 = vmatprep.subr.mxu0 0.0
      %269 = vmatpush2.msra.mxu0 0.0
      %270 = vmatprep.subr.mxu0 0.0
      %271 = vmatpush2.msra.mxu0 0.0
      %272 = vmatprep.subr.mxu0 0.0
      %273 = vmatpush2.msra.mxu0 0.0
      %274 = vmatprep.subr.mxu0 0.0
      %275 = vmatpush2.msra.mxu0 0.0
      %276 = vmatprep.subr.mxu0 0.0
      %277 = vmatpush2.msra.mxu0 0.0
      %278 = vmatprep.mubr.f32.mxu0 0.0
      %279 = vmatmul.mubr.f32.gmra.mxu0 %v212
      %v280 = vpop.f32.mrf.mxu0
      %v281 = vadd.f32 0.0, %v280
      %v282 = vpop.f32.mrf.mxu0
      %283 = vdwg.mxu0
      %v284 = vld [vmem:[%s2] sm:$0xff]
      %v285 = vld [vmem:[%s2 + $0x8] sm:$0xff]
      %v286 = vld [vmem:[%s2 + $0x10] sm:$0xff]
      %v287 = vld [vmem:[%s2 + $0x18] sm:$0xff]
      %v288 = vld [vmem:[%s3] sm:$0x1]
      %v290 = vlaneseq
      %v291 = vshrl.u32 %v290, 7
      %v292 = vsub.s32 0, %v291
      %v293 = vrot.slane %v288, %v292
      %vm295 = vcmask 261120
      %v297 = vsel %vm295, %v281, 0
      %299 = vmatprep.subr.mxu0 0.0
      %300 = vmatpush1.msra.mxu0 0.0
      %301 = vmatprep.subr.mxu0 0.0
      %302 = vmatpush1.msra.mxu0 0.0
      %303 = vmatprep.subr.mxu0 0.0
      %304 = vmatpush1.msra.mxu0 0.0
      %305 = vmatprep.subr.mxu0 0.0
      %306 = vmatpush1.msra.mxu0 0.0
      %307 = vmatprep.subr.mxu0 0.0
      %308 = vmatpush1.msra.mxu0 0.0
      %309 = vmatprep.subr.mxu0 0.0
      %310 = vmatpush1.msra.mxu0 0.0
      %311 = vmatprep.subr.mxu0 0.0
      %312 = vmatpush1.msra.mxu0 0.0
      %313 = vmatprep.subr.mxu0 0.0
      %314 = vmatpush1.msra.mxu0 0.0
      %315 = vmatprep.subr.mxu0 0.0
      %316 = vmatpush1.msra.mxu0 0.0
      %317 = vmatprep.subr.mxu0 0.0
      %318 = vmatpush1.msra.mxu0 0.0
      %319 = vmatprep.subr.mxu0 0.0
      %320 = vmatpush1.msra.mxu0 0.0
      %321 = vmatprep.subr.mxu0 0.0
      %322 = vmatpush1.msra.mxu0 0.0
      %323 = vmatprep.subr.mxu0 0.0
      %324 = vmatpush1.msra.mxu0 %v287
      %325 = vmatprep.subr.mxu0 0.0
      %326 = vmatpush1.msra.mxu0 %v286
      %327 = vmatprep.subr.mxu0 0.0
      %328 = vmatpush1.msra.mxu0 %v285
      %329 = vmatprep.subr.mxu0 0.0
      %330 = vmatpush1.msra.mxu0 %v284
      %331 = vmatprep.subr.mxu0 0.0
      %332 = vmatpush2.msra.mxu0 0.0
      %333 = vmatprep.subr.mxu0 0.0
      %334 = vmatpush2.msra.mxu0 0.0
      %335 = vmatprep.subr.mxu0 0.0
      %336 = vmatpush2.msra.mxu0 0.0
      %337 = vmatprep.subr.mxu0 0.0
      %338 = vmatpush2.msra.mxu0 0.0
      %339 = vmatprep.subr.mxu0 0.0
      %340 = vmatpush2.msra.mxu0 0.0
      %341 = vmatprep.subr.mxu0 0.0
      %342 = vmatpush2.msra.mxu0 0.0
      %343 = vmatprep.subr.mxu0 0.0
      %344 = vmatpush2.msra.mxu0 0.0
      %345 = vmatprep.subr.mxu0 0.0
      %346 = vmatpush2.msra.mxu0 0.0
      %347 = vmatprep.subr.mxu0 0.0
      %348 = vmatpush2.msra.mxu0 0.0
      %349 = vmatprep.subr.mxu0 0.0
      %350 = vmatpush2.msra.mxu0 0.0
      %351 = vmatprep.subr.mxu0 0.0
      %352 = vmatpush2.msra.mxu0 0.0
      %353 = vmatprep.subr.mxu0 0.0
      %354 = vmatpush2.msra.mxu0 0.0
      %355 = vmatprep.subr.mxu0 0.0
      %356 = vmatpush2.msra.mxu0 0.0
      %357 = vmatprep.subr.mxu0 0.0
      %358 = vmatpush2.msra.mxu0 0.0
      %359 = vmatprep.subr.mxu0 0.0
      %360 = vmatpush2.msra.mxu0 0.0
      %361 = vmatprep.subr.mxu0 0.0
      %362 = vmatpush2.msra.mxu0 0.0
      %363 = vmatprep.mubr.f32.mxu0 0.0
      %364 = vmatmul.mubr.f32.gmra.mxu0 %v297
      %v365 = vpop.f32.mrf.mxu0
      %v366 = vadd.f32 %v293, %v365
      %v367 = vpop.f32.mrf.mxu0
      %368 = vdwg.mxu0
      %vm369 = vcmask 31744
      %370 = vst.msk [vmem:[%s192] sm:$0xff] %vm369, %v366
      %p371 = scmp.lt.s32.totalorder %s15, 1
      %s372 = scalar_select %p371, %s15, 1
      %s373 = smul.addr %s372, 8
      %s374 = scalar_lea.vmem %s4, %s373
      // Predicated region
      $region37: #{tpu_custom_call.1} parent=35 // pred_check
        %p375 = pneg %p122
      $region38: #{tpu_custom_call.1} parent=35 // pred_check_branch
        %377 = sbr.rel (%p375) target = $region40
      $region39: #{tpu_custom_call.1} parent=35 // pred_region
        _
      $region40: #{tpu_custom_call.1} parent=35 // pred_fallthru
        _
    $region36: #{tpu_custom_call.1} parent=5 // pred_fallthru
      _
    %p378 = scmp.le.s32.totalorder 2, %s10
    // Predicated region
    $region41: #{tpu_custom_call.1} parent=5 // pred_check
      %p379 = pneg %p378
    $region42: #{tpu_custom_call.1} parent=5 // pred_check_branch
      %381 = sbr.rel (%p379) target = $region44
    $region43: #{tpu_custom_call.1} parent=5 // pred_region
      %s382 = ssub.s32 %s10, 2
      // Predicated region
      $region45: #{tpu_custom_call.1} parent=43 // pred_check
        %p383 = pneg %p128
      $region46: #{tpu_custom_call.1} parent=43 // pred_check_branch
        %385 = sbr.rel (%p383) target = $region48
      $region47: #{tpu_custom_call.1} parent=43 // pred_region
        %p386 = scmp.lt.s32.totalorder %s16, 1
        %s387 = scalar_select %p386, %s16, 1
        %s388 = smul.addr %s387, 8
        %s389 = scalar_lea.vmem %s4, %s388
      $region48: #{tpu_custom_call.1} parent=43 // pred_fallthru
        _
    $region44: #{tpu_custom_call.1} parent=5 // pred_fallthru
      _
  $region6: #{tpu_custom_call.1} parent=0 // loop_footer
    %s14 = sadd.s32 1, %s10
  $region7: #{tpu_custom_call.1} parent=0 // loop_footer_branch
    %9 = sbr.rel target = $region3
  $region8: #{tpu_custom_call.1} parent=0 // loop_exit
    _

</llo_original>
